<compile_context>
chip_gen: v7x
topology: tpu7x:2x2x1
jax: 0.10.0
libtpu: 0.0.40
codegen_flags: <defaults>
</compile_context>

<pallas_src>
import functools
import math

import jax
import jax.numpy as jnp
from jax.experimental import pallas as pl
from jax.experimental.pallas import tpu as pltpu


def _round_up(v, m):
    return ((v + m - 1) // m) * m


# ---------------------------------------------------------------------------
# Fused kernel.  Grid = (M tiles, K tiles); K is the reduction of matmul #1.
# ---------------------------------------------------------------------------

def _projection_head_kernel(x_ref, w1_ref, b1_ref, w2_ref, b2_ref,
                            gamma_ref, beta_ref, o_ref, *, n_valid, eps):
    k = pl.program_id(1)
    nk = pl.num_programs(1)

    # First matmul: bf16 MXU operands, f32 accumulation directly in the
    # revisited output block (no separate VMEM scratch).
    prod = jnp.dot(x_ref[...], w1_ref[...], preferred_element_type=jnp.float32)

    @pl.when(k == 0)
    def _():
        o_ref[...] = prod

    @pl.when(k > 0)
    def _():
        o_ref[...] += prod

    @pl.when(k == nk - 1)
    def _():
        projected = o_ref[...] + b1_ref[...]                  # (tm, Np) f32

        # GELU (tanh approximation; nn.GELU() default is exact erf, max
        # deviation < 1e-3 — tanh maps onto the EUP slot).
        c = 0.7978845608028654                                # sqrt(2/pi)
        p3 = projected * projected * projected
        h = 0.5 * projected * (1.0 + jnp.tanh(c * (projected + 0.044715 * p3)))

        # Second matmul (W2 resident in VMEM) + bias.
        y = jnp.dot(h.astype(jnp.bfloat16), w2_ref[...],
                    preferred_element_type=jnp.float32) + b2_ref[...]

        # TODO(synk): training-mode dropout (pltpu.prng_random_bits masking)
        # not implemented; forward follows inference semantics (identity).
        y = y + projected                                     # residual

        # LayerNorm over the n_valid real columns (padded columns of y are
        # exactly zero by construction, so only `centered` needs masking).
        inv_n = 1.0 / n_valid
        mean = jnp.sum(y, axis=-1, keepdims=True) * inv_n
        centered = y - mean
        if n_valid != y.shape[-1]:
            mask = jax.lax.broadcasted_iota(jnp.int32, y.shape, 1) < n_valid
            centered = jnp.where(mask, centered, 0.0)
        var = jnp.sum(centered * centered, axis=-1, keepdims=True) * inv_n
        inv_std = jax.lax.rsqrt(var + eps)
        o_ref[...] = centered * inv_std * gamma_ref[...] + beta_ref[...]


# ---------------------------------------------------------------------------
# pallas_call wrapper
# ---------------------------------------------------------------------------

def _pick_tm(M):
    """Pick the M tile FIRST; M is padded up to a multiple of it afterwards."""
    if M >= 512:
        return 256
    if M > 16:
        # >= 2 M tiles so the "parallel" axis can split across TCs (v7x).
        return min(256, _round_up((M + 1) // 2, 8))
    return _round_up(max(M, 1), 8)


@functools.partial(jax.jit, static_argnames=("n_valid", "eps", "tk"))
def _projection_head_call(x2d, w1p, b1p, w2p, b2p, gp, bp, *, n_valid, eps, tk):
    """x2d: (M, E) float; params already padded/laid out at __init__."""
    M, E = x2d.shape
    Kp, Np = w1p.shape

    tm = _pick_tm(M)
    Mp = _round_up(M, tm)

    # Stream x as bf16: halves HBM read and the x-tile VMEM footprint.
    xp = x2d.astype(jnp.bfloat16)
    if Mp != M or Kp != E:
        xp = jnp.pad(xp, ((0, Mp - M), (0, Kp - E)))

    nk = Kp // tk
    grid = (Mp // tm, nk)

    # Constant-index blocks: single-buffered (double-buffering them is waste).
    def const_spec(shape):
        return pl.BlockSpec(shape, lambda i, k: (0, 0),
                            pipeline_mode=pl.Buffered(1))

    if nk == 1:
        # W1 fully resident: fetched once, never re-streamed per M tile.
        w1_spec = pl.BlockSpec((tk, Np), lambda i, k: (k, 0),
                               pipeline_mode=pl.Buffered(1))
    else:
        w1_spec = pl.BlockSpec((tk, Np), lambda i, k: (k, 0))

    # Explicit VMEM budget (scoped default: 16 MiB v5e, 32 MiB v6e/v7x).
    x_bytes = 2 * tm * tk * 2
    w1_bytes = (1 if nk == 1 else 2) * tk * Np * 2
    w2_bytes = Np * Np * 2
    small_bytes = 4 * 8 * Np * 4
    out_bytes = 2 * tm * Np * 4
    footprint = x_bytes + w1_bytes + w2_bytes + small_bytes + out_bytes
    vmem_limit = int(min(96 << 20, max(footprint + (4 << 20), 32 << 20)))
    # TODO(synk): for P >= ~4096 on v7x (64 MiB physical VMEM) the resident W2
    # no longer fits; tile the second matmul's N axis in that regime.

    out = pl.pallas_call(
        functools.partial(_projection_head_kernel, n_valid=n_valid, eps=eps),
        out_shape=jax.ShapeDtypeStruct((Mp, Np), jnp.float32),
        grid_spec=pltpu.PrefetchScalarGridSpec(
            num_scalar_prefetch=0,
            grid=grid,
            in_specs=[
                pl.BlockSpec((tm, tk), lambda i, k: (i, k)),   # x tile (bf16)
                w1_spec,                                       # W1 (bf16)
                const_spec((1, Np)),                           # b1
                const_spec((Np, Np)),                          # W2 (bf16, resident)
                const_spec((1, Np)),                           # b2
                const_spec((1, Np)),                           # gamma
                const_spec((1, Np)),                           # beta
            ],
            out_specs=pl.BlockSpec((tm, Np), lambda i, k: (i, 0)),
        ),
        compiler_params=pltpu.CompilerParams(
            dimension_semantics=("parallel", "arbitrary"),
            vmem_limit_bytes=vmem_limit),
    )(xp, w1p, b1p, w2p, b2p, gp, bp)
    return out[:M, :n_valid]


# ---------------------------------------------------------------------------
# Module wrapper (parameters follow nn.Linear / nn.LayerNorm defaults)
# ---------------------------------------------------------------------------

class ProjectionHead:
    def __init__(self, key, embedding_dim, projection_dim, dropout=0.1):
        k1, k2, k3, k4 = jax.random.split(key, 4)
        lim1 = 1.0 / math.sqrt(embedding_dim)
        lim2 = 1.0 / math.sqrt(projection_dim)
        # Master params in f32, (in, out) layout.
        self.w1 = jax.random.uniform(k1, (embedding_dim, projection_dim),
                                     jnp.float32, -lim1, lim1)
        self.b1 = jax.random.uniform(k2, (projection_dim,), jnp.float32, -lim1, lim1)
        self.w2 = jax.random.uniform(k3, (projection_dim, projection_dim),
                                     jnp.float32, -lim2, lim2)
        self.b2 = jax.random.uniform(k4, (projection_dim,), jnp.float32, -lim2, lim2)
        self.gamma = jnp.ones((projection_dim,), jnp.float32)
        self.beta = jnp.zeros((projection_dim,), jnp.float32)
        self.eps = 1e-5
        self.dropout = dropout                 # inference forward: identity
        self.embedding_dim = embedding_dim
        self.projection_dim = projection_dim

        # ---- one-time kernel layout: pad + bf16-cast weights, (1, Np) vecs ----
        Np = _round_up(projection_dim, 128)
        Kp = _round_up(embedding_dim, 128)
        if Kp * Np * 2 <= (8 << 20):           # W1 (bf16) fully VMEM-resident
            tk = Kp
        else:
            tk = 512
            Kp = _round_up(embedding_dim, tk)
        self._tk = tk
        dE, dP = Kp - embedding_dim, Np - projection_dim
        self._w1p = jnp.pad(self.w1, ((0, dE), (0, dP))).astype(jnp.bfloat16)
        self._w2p = jnp.pad(self.w2, ((0, dP), (0, dP))).astype(jnp.bfloat16)
        self._b1p = jnp.pad(self.b1, (0, dP)).reshape(1, Np)
        self._b2p = jnp.pad(self.b2, (0, dP)).reshape(1, Np)
        self._gp = jnp.pad(self.gamma, (0, dP)).reshape(1, Np)
        self._bp = jnp.pad(self.beta, (0, dP)).reshape(1, Np)

    def __call__(self, x):
        lead = x.shape[:-1]
        x2d = x.reshape(-1, x.shape[-1])
        out = _projection_head_call(x2d, self._w1p, self._b1p, self._w2p,
                                    self._b2p, self._gp, self._bp,
                                    n_valid=self.projection_dim,
                                    eps=self.eps, tk=self._tk)
        return out.reshape(*lead, out.shape[-1])


# ---------------------------------------------------------------------------
# Pure-JAX reference (same tanh-GELU) for validation
# ---------------------------------------------------------------------------

def _reference(x, w1, b1, w2, b2, gamma, beta, eps):
    xf = x.astype(jnp.float32)
    projected = xf @ w1.astype(jnp.float32) + b1
    c = 0.7978845608028654
    h = 0.5 * projected * (1.0 + jnp.tanh(c * (projected + 0.044715 * projected ** 3)))
    y = h @ w2.astype(jnp.float32) + b2 + projected
    mean = y.mean(-1, keepdims=True)
    var = ((y - mean) ** 2).mean(-1, keepdims=True)
    return (y - mean) / jnp.sqrt(var + eps) * gamma + beta


if __name__ == "__main__":
    key = jax.random.PRNGKey(0)
    pkey, xkey = jax.random.split(key)

    batch, embedding_dim, projection_dim = 8, 64, 32
    head = ProjectionHead(pkey, embedding_dim, projection_dim, dropout=0.1)
    x = jax.random.normal(xkey, (batch, embedding_dim), jnp.float32)

    out = jax.block_until_ready(head(x))

    assert out.shape == (batch, projection_dim), out.shape
    assert out.dtype == jnp.float32
    assert bool(jnp.all(jnp.isfinite(out)))

    # Compare against a reference that uses the same bf16-quantized weights the
    # kernel consumes (the bf16 weight cast is a deliberate perf choice).
    ref = _reference(x, head.w1.astype(jnp.bfloat16), head.b1,
                     head.w2.astype(jnp.bfloat16), head.b2,
                     head.gamma, head.beta, head.eps)
    err = float(jnp.max(jnp.abs(out - ref)))
    assert bool(jnp.allclose(out, ref, atol=5e-2, rtol=5e-2)), err

    print("KERNEL_OK")
</pallas_src>

<mosaic_0001>
module attributes {stable_mosaic.version = 11 : i64} {
  func.func @_projection_head_kernel(%arg0: i32, %arg1: i32, %arg2: memref<8x128xbf16, #tpu.memory_space<vmem>>, %arg3: memref<128x128xbf16, #tpu.memory_space<vmem>>, %arg4: memref<1x128xf32, #tpu.memory_space<vmem>>, %arg5: memref<128x128xbf16, #tpu.memory_space<vmem>>, %arg6: memref<1x128xf32, #tpu.memory_space<vmem>>, %arg7: memref<1x128xf32, #tpu.memory_space<vmem>>, %arg8: memref<1x128xf32, #tpu.memory_space<vmem>>, %arg9: memref<8x128xf32, #tpu.memory_space<vmem>>) attributes {dimension_semantics = [#tpu.dimension_semantics<parallel>, #tpu.dimension_semantics<arbitrary>], iteration_bounds = array<i64: 1, 1>, scalar_prefetch = 0 : i64, scratch_operands = 0 : i64, tpu.core_type = #tpu.core_type<tc>, window_params = [{transform_indices = @transform_0, window_bounds = array<i64: 8, 128>}, {pipeline_mode = #tpu.pipeline_mode<synchronous>, transform_indices = @transform_1, window_bounds = array<i64: 128, 128>}, {pipeline_mode = #tpu.pipeline_mode<synchronous>, transform_indices = @transform_2, window_bounds = array<i64: 1, 128>}, {pipeline_mode = #tpu.pipeline_mode<synchronous>, transform_indices = @transform_3, window_bounds = array<i64: 128, 128>}, {pipeline_mode = #tpu.pipeline_mode<synchronous>, transform_indices = @transform_4, window_bounds = array<i64: 1, 128>}, {pipeline_mode = #tpu.pipeline_mode<synchronous>, transform_indices = @transform_5, window_bounds = array<i64: 1, 128>}, {pipeline_mode = #tpu.pipeline_mode<synchronous>, transform_indices = @transform_6, window_bounds = array<i64: 1, 128>}, {transform_indices = @transform_7, window_bounds = array<i64: 8, 128>}]} {
    %c0 = arith.constant 0 : index
    %c0_0 = arith.constant 0 : index
    %0 = vector.load %arg2[%c0, %c0_0] : memref<8x128xbf16, #tpu.memory_space<vmem>>, vector<8x128xbf16>
    %c0_1 = arith.constant 0 : index
    %c0_2 = arith.constant 0 : index
    %1 = vector.load %arg3[%c0_1, %c0_2] : memref<128x128xbf16, #tpu.memory_space<vmem>>, vector<128x128xbf16>
    %cst = arith.constant dense<0.000000e+00> : vector<8x128xf32>
    %2 = tpu.matmul %0, %1, %cst {dimension_numbers = #tpu.dot_dimension_numbers<[1], [0], [0], [1], [0, 0, 1, 1], [], []>} : vector<8x128xbf16>, vector<128x128xbf16>, vector<8x128xf32> -> vector<8x128xf32>
    %c0_i32 = arith.constant 0 : i32
    %3 = arith.cmpi eq, %arg1, %c0_i32 : i32
    %4 = arith.extui %3 : i1 to i32
    %c0_i32_3 = arith.constant 0 : i32
    %5 = arith.cmpi ne, %4, %c0_i32_3 : i32
    scf.if %5 {
      %c0_8 = arith.constant 0 : index
      %c0_9 = arith.constant 0 : index
      %12 = vector.load %arg9[%c0_8, %c0_9] : memref<8x128xf32, #tpu.memory_space<vmem>>, vector<8x128xf32>
      tpu.vector_store %arg9[%c0_8, %c0_9], %2 {strides = array<i32>} : memref<8x128xf32, #tpu.memory_space<vmem>>, vector<8x128xf32>,
    } else {
    }
    %c0_i32_4 = arith.constant 0 : i32
    %6 = arith.cmpi sgt, %arg1, %c0_i32_4 : i32
    %7 = arith.extui %6 : i1 to i32
    %c0_i32_5 = arith.constant 0 : i32
    %8 = arith.cmpi ne, %7, %c0_i32_5 : i32
    scf.if %8 {
      %c0_8 = arith.constant 0 : index
      %c0_9 = arith.constant 0 : index
      %12 = vector.load %arg9[%c0_8, %c0_9] : memref<8x128xf32, #tpu.memory_space<vmem>>, vector<8x128xf32>
      %13 = arith.addf %12, %2 : vector<8x128xf32>
      %c0_10 = arith.constant 0 : index
      %c0_11 = arith.constant 0 : index
      %14 = vector.load %arg9[%c0_10, %c0_11] : memref<8x128xf32, #tpu.memory_space<vmem>>, vector<8x128xf32>
      tpu.vector_store %arg9[%c0_10, %c0_11], %13 {strides = array<i32>} : memref<8x128xf32, #tpu.memory_space<vmem>>, vector<8x128xf32>,
    } else {
    }
    %c0_i32_6 = arith.constant 0 : i32
    %9 = arith.cmpi eq, %arg1, %c0_i32_6 : i32
    %10 = arith.extui %9 : i1 to i32
    %c0_i32_7 = arith.constant 0 : i32
    %11 = arith.cmpi ne, %10, %c0_i32_7 : i32
    scf.if %11 {
      %c0_8 = arith.constant 0 : index
      %c0_9 = arith.constant 0 : index
      %12 = vector.load %arg9[%c0_8, %c0_9] : memref<8x128xf32, #tpu.memory_space<vmem>>, vector<8x128xf32>
      %c0_10 = arith.constant 0 : index
      %c0_11 = arith.constant 0 : index
      %13 = vector.load %arg4[%c0_10, %c0_11] : memref<1x128xf32, #tpu.memory_space<vmem>>, vector<1x128xf32>
      %14 = vector.broadcast %13 : vector<1x128xf32> to vector<8x128xf32>
      %15 = arith.addf %12, %14 : vector<8x128xf32>
      %16 = arith.mulf %15, %15 : vector<8x128xf32>
      %17 = arith.mulf %16, %15 : vector<8x128xf32>
      %cst_12 = arith.constant 5.000000e-01 : f32
      %18 = vector.broadcast %cst_12 : f32 to vector<8x128xf32>
      %19 = arith.mulf %18, %15 : vector<8x128xf32>
      %cst_13 = arith.constant 4.471500e-02 : f32
      %20 = vector.broadcast %cst_13 : f32 to vector<8x128xf32>
      %21 = arith.mulf %20, %17 : vector<8x128xf32>
      %22 = arith.addf %15, %21 : vector<8x128xf32>
      %cst_14 = arith.constant 0.797884583 : f32
      %23 = vector.broadcast %cst_14 : f32 to vector<8x128xf32>
      %24 = arith.mulf %23, %22 : vector<8x128xf32>
      %25 = math.tanh %24 : vector<8x128xf32>
      %cst_15 = arith.constant 1.000000e+00 : f32
      %26 = vector.broadcast %cst_15 : f32 to vector<8x128xf32>
      %27 = arith.addf %26, %25 : vector<8x128xf32>
      %28 = arith.mulf %19, %27 : vector<8x128xf32>
      %29 = arith.truncf %28 : vector<8x128xf32> to vector<8x128xbf16>
      %c0_16 = arith.constant 0 : index
      %c0_17 = arith.constant 0 : index
      %30 = vector.load %arg5[%c0_16, %c0_17] : memref<128x128xbf16, #tpu.memory_space<vmem>>, vector<128x128xbf16>
      %cst_18 = arith.constant dense<0.000000e+00> : vector<8x128xf32>
      %31 = tpu.matmul %29, %30, %cst_18 {dimension_numbers = #tpu.dot_dimension_numbers<[1], [0], [0], [1], [0, 0, 1, 1], [], []>} : vector<8x128xbf16>, vector<128x128xbf16>, vector<8x128xf32> -> vector<8x128xf32>
      %c0_19 = arith.constant 0 : index
      %c0_20 = arith.constant 0 : index
      %32 = vector.load %arg6[%c0_19, %c0_20] : memref<1x128xf32, #tpu.memory_space<vmem>>, vector<1x128xf32>
      %33 = vector.broadcast %32 : vector<1x128xf32> to vector<8x128xf32>
      %34 = arith.addf %31, %33 : vector<8x128xf32>
      %35 = arith.addf %34, %15 : vector<8x128xf32>
      %cst_21 = arith.constant dense<0.000000e+00> : vector<8xf32>
      %36 = vector.multi_reduction <add>, %35, %cst_21 [1] : vector<8x128xf32> to vector<8xf32>
      %37 = vector.shape_cast %36 : vector<8xf32> to vector<8x1xf32>
      %cst_22 = arith.constant 3.125000e-02 : f32
      %38 = vector.broadcast %cst_22 : f32 to vector<8x1xf32>
      %39 = arith.mulf %37, %38 : vector<8x1xf32>
      %40 = vector.broadcast %39 : vector<8x1xf32> to vector<8x128xf32>
      %41 = arith.subf %35, %40 : vector<8x128xf32>
      %42 = tpu.iota {dimensions = array<i32: 1>} : vector<8x128xi32>
      %c32_i32 = arith.constant 32 : i32
      %43 = vector.broadcast %c32_i32 : i32 to vector<8x128xi32>
      %44 = arith.cmpi slt, %42, %43 : vector<8x128xi32>
      %cst_23 = arith.constant 0.000000e+00 : f32
      %45 = vector.broadcast %cst_23 : f32 to vector<8x128xf32>
      %46 = arith.select %44, %41, %45 : vector<8x128xi1>, vector<8x128xf32>
      %47 = arith.mulf %46, %46 : vector<8x128xf32>
      %cst_24 = arith.constant dense<0.000000e+00> : vector<8xf32>
      %48 = vector.multi_reduction <add>, %47, %cst_24 [1] : vector<8x128xf32> to vector<8xf32>
      %49 = vector.shape_cast %48 : vector<8xf32> to vector<8x1xf32>
      %cst_25 = arith.constant 3.125000e-02 : f32
      %50 = vector.broadcast %cst_25 : f32 to vector<8x1xf32>
      %51 = arith.mulf %49, %50 : vector<8x1xf32>
      %cst_26 = arith.constant 9.99999974E-6 : f32
      %52 = vector.broadcast %cst_26 : f32 to vector<8x1xf32>
      %53 = arith.addf %51, %52 : vector<8x1xf32>
      %54 = math.rsqrt %53 : vector<8x1xf32>
      %55 = vector.broadcast %54 : vector<8x1xf32> to vector<8x128xf32>
      %56 = arith.mulf %46, %55 : vector<8x128xf32>
      %c0_27 = arith.constant 0 : index
      %c0_28 = arith.constant 0 : index
      %57 = vector.load %arg7[%c0_27, %c0_28] : memref<1x128xf32, #tpu.memory_space<vmem>>, vector<1x128xf32>
      %58 = vector.broadcast %57 : vector<1x128xf32> to vector<8x128xf32>
      %59 = arith.mulf %56, %58 : vector<8x128xf32>
      %c0_29 = arith.constant 0 : index
      %c0_30 = arith.constant 0 : index
      %60 = vector.load %arg8[%c0_29, %c0_30] : memref<1x128xf32, #tpu.memory_space<vmem>>, vector<1x128xf32>
      %61 = vector.broadcast %60 : vector<1x128xf32> to vector<8x128xf32>
      %62 = arith.addf %59, %61 : vector<8x128xf32>
      %c0_31 = arith.constant 0 : index
      %c0_32 = arith.constant 0 : index
      %63 = vector.load %arg9[%c0_31, %c0_32] : memref<8x128xf32, #tpu.memory_space<vmem>>, vector<8x128xf32>
      tpu.vector_store %arg9[%c0_31, %c0_32], %62 {strides = array<i32>} : memref<8x128xf32, #tpu.memory_space<vmem>>, vector<8x128xf32>,
    } else {
    }
    return
  }
  func.func @transform_0(%arg0: i32, %arg1: i32) -> (i32, i32) {
    %c0_i32 = arith.constant 0 : i32
    return %arg0, %arg1 : i32, i32
  }
  func.func @transform_1(%arg0: i32, %arg1: i32) -> (i32, i32) {
    %c0_i32 = arith.constant 0 : i32
    %c0_i32_0 = arith.constant 0 : i32
    return %arg1, %c0_i32 : i32, i32
  }
  func.func @transform_2(%arg0: i32, %arg1: i32) -> (i32, i32) {
    %c0_i32 = arith.constant 0 : i32
    %c0_i32_0 = arith.constant 0 : i32
    %c0_i32_1 = arith.constant 0 : i32
    return %c0_i32, %c0_i32_0 : i32, i32
  }
  func.func @transform_3(%arg0: i32, %arg1: i32) -> (i32, i32) {
    %c0_i32 = arith.constant 0 : i32
    %c0_i32_0 = arith.constant 0 : i32
    %c0_i32_1 = arith.constant 0 : i32
    return %c0_i32, %c0_i32_0 : i32, i32
  }
  func.func @transform_4(%arg0: i32, %arg1: i32) -> (i32, i32) {
    %c0_i32 = arith.constant 0 : i32
    %c0_i32_0 = arith.constant 0 : i32
    %c0_i32_1 = arith.constant 0 : i32
    return %c0_i32, %c0_i32_0 : i32, i32
  }
  func.func @transform_5(%arg0: i32, %arg1: i32) -> (i32, i32) {
    %c0_i32 = arith.constant 0 : i32
    %c0_i32_0 = arith.constant 0 : i32
    %c0_i32_1 = arith.constant 0 : i32
    return %c0_i32, %c0_i32_0 : i32, i32
  }
  func.func @transform_6(%arg0: i32, %arg1: i32) -> (i32, i32) {
    %c0_i32 = arith.constant 0 : i32
    %c0_i32_0 = arith.constant 0 : i32
    %c0_i32_1 = arith.constant 0 : i32
    return %c0_i32, %c0_i32_0 : i32, i32
  }
  func.func @transform_7(%arg0: i32, %arg1: i32) -> (i32, i32) {
    %c0_i32 = arith.constant 0 : i32
    %c0_i32_0 = arith.constant 0 : i32
    return %arg0, %c0_i32 : i32, i32
  }
}

</mosaic_0001>

<llo_original>
// kernel: _projection_head_call.1
$region0: #{_projection_head_call.1}
  #allocation0 [shape = 'u32[]', space=smem, size = 0x4, offset = 0x4, fixed_abs, tag = 'smem constant byte address 0x4 - core index']
  #allocation1 [shape = 'u32[144,128]{1,0:T(1,128)}', space=vmem, size = 0x12000, scoped, tag = 'internal scratch']
  %s0 = inlined_call_operand.vmem [shape: bf16[8,128], index: 0, kind: input, shape index: {}]
  %s1 = inlined_call_operand.hbm [shape: bf16[128,128], index: 1, kind: input, shape index: {}]
  %s2 = inlined_call_operand.vmem [shape: f32[1,128], index: 2, kind: input, shape index: {}]
  %s3 = inlined_call_operand.hbm [shape: bf16[128,128], index: 3, kind: input, shape index: {}]
  %s4 = inlined_call_operand.vmem [shape: f32[1,128], index: 4, kind: input, shape index: {}]
  %s5 = inlined_call_operand.vmem [shape: f32[1,128], index: 5, kind: input, shape index: {}]
  %s6 = inlined_call_operand.vmem [shape: f32[1,128], index: 6, kind: input, shape index: {}]
  %s7 = inlined_call_operand.hbm [shape: f32[8,128], index: 7, kind: output, shape index: {}]
  %s8 = sld [smem:[#allocation0]]
  $region58: #{_projection_head_call.1} parent=0
    _
  %s10 = ssub.s32 1, %s8
  %s11 = scalar_select 0, %s10, %s8
  $region1: #{_projection_head_call.1} parent=0
    #allocation2 [shape = 'u8[32768]{0}', space=vmem, size = 0x8000, scoped, tag = 'input window, operand 1, single buffered']
    #allocation3 [shape = 's32[1]{0}', space=sflag, size = 0x4, scoped, tag = 'scoped memory for _projection_head_call.1']
    #allocation4 [shape = 's32[1]{0}', space=sflag, size = 0x4, scoped, tag = 'scoped memory for _projection_head_call.1']
    #allocation5 [shape = 'u8[32768]{0}', space=vmem, size = 0x8000, scoped, tag = 'input window, operand 3, single buffered']
    #allocation6 [shape = 's32[1]{0}', space=sflag, size = 0x4, scoped, tag = 'scoped memory for _projection_head_call.1']
    #allocation7 [shape = 'u8[4096]{0}', space=vmem, size = 0x1000, scoped, tag = 'output window, operand 0, single buffered']
    %12 = vsyncpa [#allocation3], 0
    %13 = vsyncpa [#allocation6], 0
    %14 = vsyncpa [#allocation4], 0
    // Predicated region
    $region2: #{_projection_head_call.1} parent=1 // pred_check
      _
    $region3: #{_projection_head_call.1} parent=1 // pred_check_branch
      %16 = sbr.rel (0) target = $region5
    $region4: #{_projection_head_call.1} parent=1 // pred_region
      _
    $region5: #{_projection_head_call.1} parent=1 // pred_fallthru
      _
    // Predicated region
    $region6: #{_projection_head_call.1} parent=1 // pred_check
      _
    $region7: #{_projection_head_call.1} parent=1 // pred_check_branch
      %18 = sbr.rel (0) target = $region9
    $region8: #{_projection_head_call.1} parent=1 // pred_region
      %s20 = ssub.s32 1024, 1024
      %21 = vsyncadd [#allocation3], %s20
      %s22 = sshll.u32 [#allocation2], 4
      %s23 = int_to_ptr.vmem [resolvable:$true] %s22
      %28 = dma.hbm_to_vmem [thread:$0]  %s1, 1024, %s23, [#allocation3], 64, 64, 4
    $region9: #{_projection_head_call.1} parent=1 // pred_fallthru
      _
    // Predicated region
    $region10: #{_projection_head_call.1} parent=1 // pred_check
      _
    $region11: #{_projection_head_call.1} parent=1 // pred_check_branch
      %30 = sbr.rel (0) target = $region13
    $region12: #{_projection_head_call.1} parent=1 // pred_region
      _
    $region13: #{_projection_head_call.1} parent=1 // pred_fallthru
      _
    // Predicated region
    $region14: #{_projection_head_call.1} parent=1 // pred_check
      _
    $region15: #{_projection_head_call.1} parent=1 // pred_check_branch
      %32 = sbr.rel (0) target = $region17
    $region16: #{_projection_head_call.1} parent=1 // pred_region
      %s34 = ssub.s32 1024, 1024
      %35 = vsyncadd [#allocation6], %s34
      %s36 = sshll.u32 [#allocation5], 4
      %s37 = int_to_ptr.vmem [resolvable:$true] %s36
      %42 = dma.hbm_to_vmem [thread:$0]  %s3, 1024, %s37, [#allocation6], 64, 64, 4
    $region17: #{_projection_head_call.1} parent=1 // pred_fallthru
      _
    // Predicated region
    $region18: #{_projection_head_call.1} parent=1 // pred_check
      _
    $region19: #{_projection_head_call.1} parent=1 // pred_check_branch
      %44 = sbr.rel (0) target = $region21
    $region20: #{_projection_head_call.1} parent=1 // pred_region
      _
    $region21: #{_projection_head_call.1} parent=1 // pred_fallthru
      _
    // Predicated region
    $region22: #{_projection_head_call.1} parent=1 // pred_check
      _
    $region23: #{_projection_head_call.1} parent=1 // pred_check_branch
      %46 = sbr.rel (0) target = $region25
    $region24: #{_projection_head_call.1} parent=1 // pred_region
      _
    $region25: #{_projection_head_call.1} parent=1 // pred_fallthru
      _
    // Predicated region
    $region26: #{_projection_head_call.1} parent=1 // pred_check
      _
    $region27: #{_projection_head_call.1} parent=1 // pred_check_branch
      %48 = sbr.rel (0) target = $region29
    $region28: #{_projection_head_call.1} parent=1 // pred_region
      _
    $region29: #{_projection_head_call.1} parent=1 // pred_fallthru
      _
    // Predicated region
    $region30: #{_projection_head_call.1} parent=1 // pred_check
      _
    $region31: #{_projection_head_call.1} parent=1 // pred_check_branch
      %50 = sbr.rel (0) target = $region33
    $region32: #{_projection_head_call.1} parent=1 // pred_region
      %51 = dma.done [#allocation3], 1024
    $region33: #{_projection_head_call.1} parent=1 // pred_fallthru
      _
    // Predicated region
    $region34: #{_projection_head_call.1} parent=1 // pred_check
      _
    $region35: #{_projection_head_call.1} parent=1 // pred_check_branch
      %53 = sbr.rel (0) target = $region37
    $region36: #{_projection_head_call.1} parent=1 // pred_region
      %54 = dma.done [#allocation6], 1024
    $region37: #{_projection_head_call.1} parent=1 // pred_fallthru
      _
    %v56 = vld [vmem:[%s0] sm:$0xf]
    %v57 = vld [vmem:[#allocation2] sm:$0xf]
    %v58 = vld [vmem:[#allocation2 + $0x4] sm:$0xf]
    %v59 = vld [vmem:[#allocation2 + $0x8] sm:$0xf]
    %v60 = vld [vmem:[#allocation2 + $0xc] sm:$0xf]
    %v61 = vld [vmem:[#allocation2 + $0x10] sm:$0xf]
    %v62 = vld [vmem:[#allocation2 + $0x14] sm:$0xf]
    %v63 = vld [vmem:[#allocation2 + $0x18] sm:$0xf]
    %v64 = vld [vmem:[#allocation2 + $0x1c] sm:$0xf]
    %v65 = vld [vmem:[#allocation2 + $0x20] sm:$0xf]
    %v66 = vld [vmem:[#allocation2 + $0x24] sm:$0xf]
    %v67 = vld [vmem:[#allocation2 + $0x28] sm:$0xf]
    %v68 = vld [vmem:[#allocation2 + $0x2c] sm:$0xf]
    %v69 = vld [vmem:[#allocation2 + $0x30] sm:$0xf]
    %v70 = vld [vmem:[#allocation2 + $0x34] sm:$0xf]
    %v71 = vld [vmem:[#allocation2 + $0x38] sm:$0xf]
    %v72 = vld [vmem:[#allocation2 + $0x3c] sm:$0xf]
    %v89 = vunpack.c.l.b16 %v57
    %v90 = vunpack.c.l.b16 %v58
    %v91 = vunpack.c.l.b16 %v59
    %v92 = vunpack.c.l.b16 %v60
    %v93 = vunpack.c.l.b16 %v61
    %v94 = vunpack.c.l.b16 %v62
    %v95 = vunpack.c.l.b16 %v63
    %v96 = vunpack.c.l.b16 %v64
    %v97 = vunpack.c.l.b16 %v65
    %v98 = vunpack.c.l.b16 %v66
    %v99 = vunpack.c.l.b16 %v67
    %v100 = vunpack.c.l.b16 %v68
    %v101 = vunpack.c.l.b16 %v69
    %v102 = vunpack.c.l.b16 %v70
    %v103 = vunpack.c.l.b16 %v71
    %v104 = vunpack.c.l.b16 %v72
    %v105 = vpack.c.b16 %v90, %v89
    %v106 = vpack.c.b16 %v92, %v91
    %v107 = vpack.c.b16 %v94, %v93
    %v108 = vpack.c.b16 %v96, %v95
    %v109 = vpack.c.b16 %v98, %v97
    %v110 = vpack.c.b16 %v100, %v99
    %v111 = vpack.c.b16 %v102, %v101
    %v112 = vpack.c.b16 %v104, %v103
    %121 = vmatprep.subr.bf16.mxu0 0
    %122 = vmatpush1.bf16.msra.mxu0 %v105
    %123 = vmatprep.subr.bf16.mxu0 0
    %124 = vmatpush1.bf16.msra.mxu0 %v106
    %125 = vmatprep.subr.bf16.mxu0 0
    %126 = vmatpush1.bf16.msra.mxu0 %v107
    %127 = vmatprep.subr.bf16.mxu0 0
    %128 = vmatpush1.bf16.msra.mxu0 %v108
    %129 = vmatprep.subr.bf16.mxu0 0
    %130 = vmatpush1.bf16.msra.mxu0 %v109
    %131 = vmatprep.subr.bf16.mxu0 0
    %132 = vmatpush1.bf16.msra.mxu0 %v110
    %133 = vmatprep.subr.bf16.mxu0 0
    %134 = vmatpush1.bf16.msra.mxu0 %v111
    %135 = vmatprep.subr.bf16.mxu0 0
    %136 = vmatpush1.bf16.msra.mxu0 %v112
    %137 = vmatprep.subr.bf16.mxu0 0
    %138 = vmatpush1.bf16.msra.mxu0 0
    %139 = vmatprep.subr.bf16.mxu0 0
    %140 = vmatpush1.bf16.msra.mxu0 0
    %141 = vmatprep.subr.bf16.mxu0 0
    %142 = vmatpush1.bf16.msra.mxu0 0
    %143 = vmatprep.subr.bf16.mxu0 0
    %144 = vmatpush1.bf16.msra.mxu0 0
    %145 = vmatprep.subr.bf16.mxu0 0
    %146 = vmatpush1.bf16.msra.mxu0 0
    %147 = vmatprep.subr.bf16.mxu0 0
    %148 = vmatpush1.bf16.msra.mxu0 0
    %149 = vmatprep.subr.bf16.mxu0 0
    %150 = vmatpush1.bf16.msra.mxu0 0
    %151 = vmatprep.subr.bf16.mxu0 0
    %152 = vmatpush1.bf16.msra.mxu0 0
    %153 = vmatprep.mubr.bf16.mxu0 0
    %154 = vmatmul.mubr.bf16.gmra.mrb[0].mxu0 %v56
    %v155 = vpop.f32.mrb[0].mxu0
    %v156 = vadd.f32 0.0, %v155
    %v157 = vpop.f32.mrb[0].mxu0
    %v158 = vpop.f32.mrb[0].mxu0
    %v159 = vpop.f32.mrb[0].mxu0
    %160 = vdwg.mxu0
    %p161 = scmp.eq.s32.totalorder 0, 0
    // Predicated region
    $region38: #{_projection_head_call.1} parent=1 // pred_check
      %p162 = pneg %p161
    $region39: #{_projection_head_call.1} parent=1 // pred_check_branch
      %164 = sbr.rel (%p162) target = $region41
    $region40: #{_projection_head_call.1} parent=1 // pred_region
      %165 = vst [vmem:[#allocation7] sm:$0xff] %v156
    $region41: #{_projection_head_call.1} parent=1 // pred_fallthru
      _
    %p166 = scmp.gt.s32.totalorder 0, 0
    // Predicated region
    $region42: #{_projection_head_call.1} parent=1 // pred_check
      %p167 = pneg %p166
    $region43: #{_projection_head_call.1} parent=1 // pred_check_branch
      %169 = sbr.rel (%p167) target = $region45
    $region44: #{_projection_head_call.1} parent=1 // pred_region
      %v170 = vld [vmem:[#allocation7] sm:$0xff]
      %v171 = vadd.f32 %v170, %v156
      %172 = vst [vmem:[#allocation7] sm:$0xff] %v171
    $region45: #{_projection_head_call.1} parent=1 // pred_fallthru
      _
    // Predicated region
    $region46: #{_projection_head_call.1} parent=1 // pred_check
      %p173 = pneg %p161
    $region47: #{_projection_head_call.1} parent=1 // pred_check_branch
      %175 = sbr.rel (%p173) target = $region49
    $region48: #{_projection_head_call.1} parent=1 // pred_region
      %v176 = vld [vmem:[#allocation7] sm:$0xff]
      %v177 = vld [vmem:[%s2] sm:$0x1]
      %v179 = vlaneseq
      %v180 = vshrl.u32 %v179, 7
      %v181 = vsub.s32 0, %v180
      %v182 = vrot.slane %v177, %v181
      %v184 = vadd.f32 %v176, %v182
      %v185 = vmul.f32 %v184, %v184
      %v186 = vmul.f32 %v185, %v184
      %v187 = vmul.f32 %v184, 0.5
      %v188 = vmul.f32 %v186, 0.044715
      %v189 = vadd.f32 %v184, %v188
      %v190 = vmul.f32 %v189, 0.7978846
      %v191 = vtanh.pop %v190
      %v192 = vadd.f32 %v191, 1.0
      %v193 = vmul.f32 %v187, %v192
      %v194 = vpack.c.bf16 %v193, %v193
      %v195 = vld [vmem:[#allocation5] sm:$0xf]
      %v196 = vld [vmem:[#allocation5 + $0x4] sm:$0xf]
      %v197 = vld [vmem:[#allocation5 + $0x8] sm:$0xf]
      %v198 = vld [vmem:[#allocation5 + $0xc] sm:$0xf]
      %v199 = vld [vmem:[#allocation5 + $0x10] sm:$0xf]
      %v200 = vld [vmem:[#allocation5 + $0x14] sm:$0xf]
      %v201 = vld [vmem:[#allocation5 + $0x18] sm:$0xf]
      %v202 = vld [vmem:[#allocation5 + $0x1c] sm:$0xf]
      %v203 = vld [vmem:[#allocation5 + $0x20] sm:$0xf]
      %v204 = vld [vmem:[#allocation5 + $0x24] sm:$0xf]
      %v205 = vld [vmem:[#allocation5 + $0x28] sm:$0xf]
      %v206 = vld [vmem:[#allocation5 + $0x2c] sm:$0xf]
      %v207 = vld [vmem:[#allocation5 + $0x30] sm:$0xf]
      %v208 = vld [vmem:[#allocation5 + $0x34] sm:$0xf]
      %v209 = vld [vmem:[#allocation5 + $0x38] sm:$0xf]
      %v210 = vld [vmem:[#allocation5 + $0x3c] sm:$0xf]
      %v211 = vld [vmem:[%s4] sm:$0x1]
      %v213 = vlaneseq
      %v214 = vshrl.u32 %v213, 7
      %v215 = vsub.s32 0, %v214
      %v216 = vrot.slane %v211, %v215
      %v234 = vunpack.c.l.b16 %v195
      %v235 = vunpack.c.l.b16 %v196
      %v236 = vunpack.c.l.b16 %v197
      %v237 = vunpack.c.l.b16 %v198
      %v238 = vunpack.c.l.b16 %v199
      %v239 = vunpack.c.l.b16 %v200
      %v240 = vunpack.c.l.b16 %v201
      %v241 = vunpack.c.l.b16 %v202
      %v242 = vunpack.c.l.b16 %v203
      %v243 = vunpack.c.l.b16 %v204
      %v244 = vunpack.c.l.b16 %v205
      %v245 = vunpack.c.l.b16 %v206
      %v246 = vunpack.c.l.b16 %v207
      %v247 = vunpack.c.l.b16 %v208
      %v248 = vunpack.c.l.b16 %v209
      %v249 = vunpack.c.l.b16 %v210
      %v250 = vpack.c.b16 %v235, %v234
      %v251 = vpack.c.b16 %v237, %v236
      %v252 = vpack.c.b16 %v239, %v238
      %v253 = vpack.c.b16 %v241, %v240
      %v254 = vpack.c.b16 %v243, %v242
      %v255 = vpack.c.b16 %v245, %v244
      %v256 = vpack.c.b16 %v247, %v246
      %v257 = vpack.c.b16 %v249, %v248
      %266 = vmatprep.subr.bf16.mxu0 0
      %267 = vmatpush1.bf16.msra.mxu0 %v250
      %268 = vmatprep.subr.bf16.mxu0 0
      %269 = vmatpush1.bf16.msra.mxu0 %v251
      %270 = vmatprep.subr.bf16.mxu0 0
      %271 = vmatpush1.bf16.msra.mxu0 %v252
      %272 = vmatprep.subr.bf16.mxu0 0
      %273 = vmatpush1.bf16.msra.mxu0 %v253
      %274 = vmatprep.subr.bf16.mxu0 0
      %275 = vmatpush1.bf16.msra.mxu0 %v254
      %276 = vmatprep.subr.bf16.mxu0 0
      %277 = vmatpush1.bf16.msra.mxu0 %v255
      %278 = vmatprep.subr.bf16.mxu0 0
      %279 = vmatpush1.bf16.msra.mxu0 %v256
      %280 = vmatprep.subr.bf16.mxu0 0
      %281 = vmatpush1.bf16.msra.mxu0 %v257
      %282 = vmatprep.subr.bf16.mxu0 0
      %283 = vmatpush1.bf16.msra.mxu0 0
      %284 = vmatprep.subr.bf16.mxu0 0
      %285 = vmatpush1.bf16.msra.mxu0 0
      %286 = vmatprep.subr.bf16.mxu0 0
      %287 = vmatpush1.bf16.msra.mxu0 0
      %288 = vmatprep.subr.bf16.mxu0 0
      %289 = vmatpush1.bf16.msra.mxu0 0
      %290 = vmatprep.subr.bf16.mxu0 0
      %291 = vmatpush1.bf16.msra.mxu0 0
      %292 = vmatprep.subr.bf16.mxu0 0
      %293 = vmatpush1.bf16.msra.mxu0 0
      %294 = vmatprep.subr.bf16.mxu0 0
      %295 = vmatpush1.bf16.msra.mxu0 0
      %296 = vmatprep.subr.bf16.mxu0 0
      %297 = vmatpush1.bf16.msra.mxu0 0
      %298 = vmatprep.mubr.bf16.mxu0 0
      %299 = vmatmul.mubr.bf16.gmra.mrb[0].mxu0 %v194
      %v300 = vpop.f32.mrb[0].mxu0
      %v301 = vadd.f32 %v216, %v300
      %v302 = vpop.f32.mrb[0].mxu0
      %v303 = vpop.f32.mrb[0].mxu0
      %v304 = vpop.f32.mrb[0].mxu0
      %305 = vdwg.mxu0
      %v306 = vadd.f32 %v301, %v184
      %307 = vadd.xlane.f32.xlu0 %v306
      %v308 = vpop.xlane.xlu0 %307
      %v309 = vmul.f32 %v308, 0.03125
      %v310 = vsub.f32 %v306, %v309
      %v311 = vlaneseq
      %v312 = vand.u32 %v311, 127
      %vm313 = vcmp.lt.s32.totalorder %v312, 32
      %v314 = vsel %vm313, %v310, 0.0
      %v315 = vmul.f32 %v314, %v314
      %316 = vadd.xlane.f32.xlu0 %v315
      %v317 = vpop.xlane.xlu0 %316
      %v318 = vmul.f32 %v317, 0.03125
      %v319 = vadd.f32 %v318, 1e-05
      %v320 = vrsqrt.pop %v319
      %v321 = vmul.f32 %v314, %v320
      %v322 = vld [vmem:[%s5] sm:$0x1]
      %v324 = vlaneseq
      %v325 = vshrl.u32 %v324, 7
      %v326 = vsub.s32 0, %v325
      %v327 = vrot.slane %v322, %v326
      %v329 = vmul.f32 %v321, %v327
      %v330 = vld [vmem:[%s6] sm:$0x1]
      %v332 = vlaneseq
      %v333 = vshrl.u32 %v332, 7
      %v334 = vsub.s32 0, %v333
      %v335 = vrot.slane %v330, %v334
      %v337 = vadd.f32 %v329, %v335
      %338 = vst [vmem:[#allocation7] sm:$0xff] %v337
    $region49: #{_projection_head_call.1} parent=1 // pred_fallthru
      _
    // Predicated region
    $region50: #{_projection_head_call.1} parent=1 // pred_check
      _
    $region51: #{_projection_head_call.1} parent=1 // pred_check_branch
      %340 = sbr.rel (0) target = $region53
    $region52: #{_projection_head_call.1} parent=1 // pred_region
      %s342 = ssub.s32 128, 128
      %343 = vsyncadd [#allocation4], %s342
      %s345 = sshll.u32 [#allocation7], 4
      %s346 = int_to_ptr.vmem [resolvable:$true] %s345
      %348 = dma.vmem_to_hbm [thread:$0]  %s346, 128, %s7, [#allocation4]
    $region53: #{_projection_head_call.1} parent=1 // pred_fallthru
      _
    // Predicated region
    $region54: #{_projection_head_call.1} parent=1 // pred_check
      _
    $region55: #{_projection_head_call.1} parent=1 // pred_check_branch
      %350 = sbr.rel (0) target = $region57
    $region56: #{_projection_head_call.1} parent=1 // pred_region
      %351 = dma.done [#allocation4], 128
    $region57: #{_projection_head_call.1} parent=1 // pred_fallthru
      _
    %352 = vsyncpa [#allocation3], 1
    %353 = vsyncpa [#allocation6], 1
    %354 = vsyncpa [#allocation4], 1

</llo_original>
